<compile_context>
chip_gen: v6e
topology: v6e:2x2x1
jax: 0.10.0
libtpu: 0.0.40
codegen_flags: <defaults>
</compile_context>

<pallas_src>
import math

import jax
import jax.numpy as jnp
from jax.experimental import pallas as pl
from jax.experimental.pallas import tpu as pltpu

LN_EPS = 1e-5                       # torch nn.LayerNorm default
_SQRT_2_OVER_PI = 0.7978845608028654
_GELU_C = 0.044715


def _gelu_tanh(x):
    # ACT2FN["gelu_pytorch_tanh"]
    return 0.5 * x * (1.0 + jnp.tanh(_SQRT_2_OVER_PI * (x + _GELU_C * x * x * x)))


def _ln_gelu(x_f32, w, b, true_dim, compute_dtype):
    """One-pass LayerNorm + tanh-GELU.

    Statistics (mean / E[x^2] / rsqrt) in f32 and divided by the TRUE feature
    dim (padded columns are zero and have zero LN weight/bias, so they stay
    zero).  The scale/shift application and the GELU run in `compute_dtype`
    (bf16 on v6e/v7x, f32 on v5e)."""
    inv_n = 1.0 / float(true_dim)
    mu = jnp.sum(x_f32, axis=-1, keepdims=True) * inv_n
    ex2 = jnp.sum(x_f32 * x_f32, axis=-1, keepdims=True) * inv_n
    var = jnp.maximum(ex2 - mu * mu, 0.0)
    rstd = jax.lax.rsqrt(var + LN_EPS)
    scale = w * rstd                       # (rows, dim) f32
    shift = b - mu * scale                 # (rows, dim) f32
    y = (x_f32.astype(compute_dtype) * scale.astype(compute_dtype)
         + shift.astype(compute_dtype))
    return _gelu_tanh(y)


def _make_kernel(h_true, d_true, n_sub, sub_m, compute_dtype, matmul_dtype):
    def kernel(x_ref, ln1_w_ref, ln1_b_ref, w1_ref,
               ln2_w_ref, ln2_b_ref, w2_ref, b2_ref, o_ref):
        ln1_w, ln1_b = ln1_w_ref[...], ln1_b_ref[...]
        ln2_w, ln2_b = ln2_w_ref[...], ln2_b_ref[...]
        w1, w2, b2 = w1_ref[...], w2_ref[...], b2_ref[...]
        # Straight-line unroll over independent row sub-chunks: the LLO
        # scheduler can overlap sub-chunk j+1's VPU/EUP work with sub-chunk j's
        # MXU matmuls (one basic block, no data deps between chunks).
        for j in range(n_sub):
            r = j * sub_m
            x = x_ref[r:r + sub_m, :].astype(jnp.float32)
            a1 = _ln_gelu(x, ln1_w, ln1_b, h_true, compute_dtype)
            z1 = jnp.dot(a1.astype(matmul_dtype), w1,
                         preferred_element_type=jnp.float32)
            a2 = _ln_gelu(z1, ln2_w, ln2_b, d_true, compute_dtype)
            z2 = jnp.dot(a2.astype(matmul_dtype), w2,
                         preferred_element_type=jnp.float32) + b2
            o_ref[r:r + sub_m, :] = z2.astype(o_ref.dtype)
    return kernel


def _round_up(x, m):
    return -(-x // m) * m


def causal_rcn_token_mixer(x, params, *, block_m=1024,
                           compute_dtype=None, matmul_dtype=jnp.bfloat16,
                           io_dtype=None):
    """CausalRCNTokenMixer.forward (eval) on an input of shape (..., hidden_dim)."""
    *lead, H = x.shape
    D = params["w1"].shape[1]
    M = 1
    for s in lead:
        M *= s

    dk = jax.devices()[0].device_kind.lower()
    is_v7 = "v7" in dk
    has_bf16_vpu = ("v6" in dk) or is_v7            # v5e: no bf16 VPU/EUP
    if compute_dtype is None:
        compute_dtype = jnp.bfloat16 if has_bf16_vpu else jnp.float32

    # ---- generation-aware VMEM budget --------------------------------------
    try:
        vmem_cap = int(pltpu.get_tpu_info().vmem_capacity_bytes)
    except Exception:                                # unknown -> assume v7x
        vmem_cap = 64 * 1024 * 1024
    # ~48 MiB on v7x (64 MiB physical), ~96-100 MiB on v5e/v6e (128 MiB).
    vmem_limit = max(32 * 1024 * 1024,
                     min(int(0.75 * vmem_cap), 100 * 1024 * 1024))

    # ---- pad feature dims to lane multiples of 128 (zero weights) ----------
    Hp, Dp = _round_up(H, 128), _round_up(D, 128)

    def pad2(a, r, c):
        return jnp.pad(a, ((0, r - a.shape[0]), (0, c - a.shape[1])))

    w1 = pad2(params["w1"], Hp, Dp).astype(matmul_dtype)
    w2 = pad2(params["w2"], Dp, Hp).astype(matmul_dtype)
    ln1_w = pad2(params["ln1_w"], 1, Hp)
    ln1_b = pad2(params["ln1_b"], 1, Hp)
    ln2_w = pad2(params["ln2_w"], 1, Dp)
    ln2_b = pad2(params["ln2_b"], 1, Dp)
    b2 = pad2(params["b2"], 1, Hp)
    weight_args = (ln1_w, ln1_b, w1, ln2_w, ln2_b, w2, b2)
    # TODO(synk): for very large H*D (single-buffered bf16 weights > ~20-25 MiB
    # each on v7x's 64 MiB VMEM) keep w1/w2 in HBM (memory_space=pl.ANY) and
    # stream K/N tiles with pltpu.emit_pipeline instead of whole-weight residency.

    out_dtype = io_dtype if io_dtype is not None else x.dtype
    in_itemsize = jnp.dtype(out_dtype if io_dtype is not None else x.dtype).itemsize

    # ---- row-block sizing from the VMEM budget -----------------------------
    weight_bytes = sum(int(a.size) * a.dtype.itemsize for a in weight_args)
    # double-buffered x + out blocks plus in-kernel f32 temporaries (conservative)
    per_row = (2 * Hp * in_itemsize + 2 * Hp * jnp.dtype(out_dtype).itemsize
               + 4 * (2 * Hp + 3 * Dp))
    budget = int(0.8 * vmem_limit) - weight_bytes
    bm_cap = max(8, min(block_m, budget // per_row))
    bm_cap = (bm_cap // 8) * 8

    # balanced row blocks: padding < 8 rows instead of up to bm-1
    n_blocks = -(-M // bm_cap)
    bm = _round_up(-(-M // n_blocks), 8)
    m_pad = n_blocks * bm

    # intra-tile sub-chunking for VPU/EUP <-> MXU overlap
    n_sub = 1
    for cand in (4, 2):
        if bm % (cand * 8) == 0 and bm // cand >= 128:
            n_sub = cand
            break
    sub_m = bm // n_sub

    xf = x.reshape(M, H)
    if io_dtype is not None:
        xf = xf.astype(io_dtype)
    xf = jnp.pad(xf, ((0, m_pad - M), (0, Hp - H)))

    kernel = _make_kernel(H, D, n_sub, sub_m, compute_dtype, matmul_dtype)

    # Rows are independent; on v7x actually shard the grid across the 2 TCs.
    sem = pltpu.CORE_PARALLEL if (is_v7 and n_blocks >= 2) else pltpu.PARALLEL
    cparams = pltpu.CompilerParams(dimension_semantics=(sem,),
                                   vmem_limit_bytes=vmem_limit)

    def build(single_buffer_weights):
        in_specs = [pl.BlockSpec((bm, Hp), lambda i: (i, 0))]
        for p in weight_args:
            idx = lambda i, _nd=p.ndim: (0,) * _nd
            if single_buffer_weights:
                # Constant index map -> never refetched; single buffer halves
                # the weight VMEM footprint (double-buffering them is waste).
                spec = pl.BlockSpec(p.shape, idx, pipeline_mode=pl.Buffered(1))
            else:
                spec = pl.BlockSpec(p.shape, idx)
            in_specs.append(spec)
        return pl.pallas_call(
            kernel,
            out_shape=jax.ShapeDtypeStruct((m_pad, Hp), out_dtype),
            grid=(n_blocks,),
            in_specs=in_specs,
            out_specs=pl.BlockSpec((bm, Hp), lambda i: (i, 0)),
            compiler_params=cparams,
        )

    try:
        out = build(True)(xf, *weight_args)
    except Exception:
        # Fallback if this jax build rejects pipeline_mode on the outer pipeline.
        out = build(False)(xf, *weight_args)

    return out[:M, :H].reshape(*lead, H)


# ---------------------------------------------------------------------------
# Synthetic params + pure-JAX reference (the semantic spec, f32).
# ---------------------------------------------------------------------------
def init_params(key, hidden_dim, internal_dim):
    """Linear weights stored pre-transposed as (in, out); LN params as (1, dim)."""
    k1, k2, k3 = jax.random.split(key, 3)
    s1 = 1.0 / math.sqrt(hidden_dim)
    s2 = 1.0 / math.sqrt(internal_dim)
    return {
        "ln1_w": jnp.ones((1, hidden_dim), jnp.float32),
        "ln1_b": jnp.zeros((1, hidden_dim), jnp.float32),
        "w1": jax.random.uniform(k1, (hidden_dim, internal_dim),
                                 jnp.float32, -s1, s1),
        "ln2_w": jnp.ones((1, internal_dim), jnp.float32),
        "ln2_b": jnp.zeros((1, internal_dim), jnp.float32),
        "w2": jax.random.uniform(k2, (internal_dim, hidden_dim),
                                 jnp.float32, -s2, s2),
        "b2": jax.random.uniform(k3, (1, hidden_dim), jnp.float32, -s2, s2),
    }


def _layer_norm_ref(x, w, b, eps=LN_EPS):
    mu = jnp.mean(x, axis=-1, keepdims=True)
    xc = x - mu
    var = jnp.mean(xc * xc, axis=-1, keepdims=True)
    return xc * jax.lax.rsqrt(var + eps) * w + b


def _reference(x, params):
    a1 = _gelu_tanh(_layer_norm_ref(x, params["ln1_w"], params["ln1_b"]))
    z1 = a1 @ params["w1"]
    a2 = _gelu_tanh(_layer_norm_ref(z1, params["ln2_w"], params["ln2_b"]))
    return a2 @ params["w2"] + params["b2"]


if __name__ == "__main__":
    B, T, H, D = 2, 8, 32, 64       # batch, seq, hidden_dim, internal_dim

    key = jax.random.PRNGKey(0)
    kx, kp = jax.random.split(key)
    x = jax.random.normal(kx, (B, T, H), jnp.float32)
    params = init_params(kp, H, D)

    out = causal_rcn_token_mixer(x, params)
    out = jax.block_until_ready(out)

    ref = _reference(x, params)
    assert out.shape == (B, T, H)
    assert bool(jnp.all(jnp.isfinite(out)))
    # bf16 matmul operands (+ bf16 elementwise on v6e/v7x) with f32
    # accumulation -> loose tolerance.  Use matmul_dtype=compute_dtype=float32
    # for tight parity with the PyTorch f32 module.
    assert bool(jnp.allclose(out, ref, atol=5e-2, rtol=5e-2))
    print("KERNEL_OK")
</pallas_src>

<mosaic_0001>
module attributes {stable_mosaic.version = 11 : i64} {
  func.func @kernel(%arg0: i32, %arg1: memref<16x128xf32, #tpu.memory_space<vmem>>, %arg2: memref<1x128xf32, #tpu.memory_space<vmem>>, %arg3: memref<1x128xf32, #tpu.memory_space<vmem>>, %arg4: memref<128x128xbf16, #tpu.memory_space<vmem>>, %arg5: memref<1x128xf32, #tpu.memory_space<vmem>>, %arg6: memref<1x128xf32, #tpu.memory_space<vmem>>, %arg7: memref<128x128xbf16, #tpu.memory_space<vmem>>, %arg8: memref<1x128xf32, #tpu.memory_space<vmem>>, %arg9: memref<16x128xf32, #tpu.memory_space<vmem>>) attributes {dimension_semantics = [#tpu.dimension_semantics<parallel>], iteration_bounds = array<i64: 1>, scalar_prefetch = 0 : i64, scratch_operands = 0 : i64, tpu.core_type = #tpu.core_type<tc>, window_params = [{transform_indices = @transform_0, window_bounds = array<i64: 16, 128>}, {pipeline_mode = #tpu.pipeline_mode<synchronous>, transform_indices = @transform_1, window_bounds = array<i64: 1, 128>}, {pipeline_mode = #tpu.pipeline_mode<synchronous>, transform_indices = @transform_2, window_bounds = array<i64: 1, 128>}, {pipeline_mode = #tpu.pipeline_mode<synchronous>, transform_indices = @transform_3, window_bounds = array<i64: 128, 128>}, {pipeline_mode = #tpu.pipeline_mode<synchronous>, transform_indices = @transform_4, window_bounds = array<i64: 1, 128>}, {pipeline_mode = #tpu.pipeline_mode<synchronous>, transform_indices = @transform_5, window_bounds = array<i64: 1, 128>}, {pipeline_mode = #tpu.pipeline_mode<synchronous>, transform_indices = @transform_6, window_bounds = array<i64: 128, 128>}, {pipeline_mode = #tpu.pipeline_mode<synchronous>, transform_indices = @transform_7, window_bounds = array<i64: 1, 128>}, {transform_indices = @transform_8, window_bounds = array<i64: 16, 128>}]} {
    %c0 = arith.constant 0 : index
    %c0_0 = arith.constant 0 : index
    %0 = vector.load %arg2[%c0, %c0_0] : memref<1x128xf32, #tpu.memory_space<vmem>>, vector<1x128xf32>
    %c0_1 = arith.constant 0 : index
    %c0_2 = arith.constant 0 : index
    %1 = vector.load %arg3[%c0_1, %c0_2] : memref<1x128xf32, #tpu.memory_space<vmem>>, vector<1x128xf32>
    %c0_3 = arith.constant 0 : index
    %c0_4 = arith.constant 0 : index
    %2 = vector.load %arg5[%c0_3, %c0_4] : memref<1x128xf32, #tpu.memory_space<vmem>>, vector<1x128xf32>
    %c0_5 = arith.constant 0 : index
    %c0_6 = arith.constant 0 : index
    %3 = vector.load %arg6[%c0_5, %c0_6] : memref<1x128xf32, #tpu.memory_space<vmem>>, vector<1x128xf32>
    %c0_7 = arith.constant 0 : index
    %c0_8 = arith.constant 0 : index
    %4 = vector.load %arg4[%c0_7, %c0_8] : memref<128x128xbf16, #tpu.memory_space<vmem>>, vector<128x128xbf16>
    %c0_9 = arith.constant 0 : index
    %c0_10 = arith.constant 0 : index
    %5 = vector.load %arg7[%c0_9, %c0_10] : memref<128x128xbf16, #tpu.memory_space<vmem>>, vector<128x128xbf16>
    %c0_11 = arith.constant 0 : index
    %c0_12 = arith.constant 0 : index
    %6 = vector.load %arg8[%c0_11, %c0_12] : memref<1x128xf32, #tpu.memory_space<vmem>>, vector<1x128xf32>
    %c0_13 = arith.constant 0 : index
    %c0_14 = arith.constant 0 : index
    %7 = vector.load %arg1[%c0_13, %c0_14] : memref<16x128xf32, #tpu.memory_space<vmem>>, vector<16x128xf32>
    %cst = arith.constant dense<0.000000e+00> : vector<16xf32>
    %8 = vector.multi_reduction <add>, %7, %cst [1] : vector<16x128xf32> to vector<16xf32>
    %9 = vector.shape_cast %8 : vector<16xf32> to vector<16x1xf32>
    %cst_15 = arith.constant 3.125000e-02 : f32
    %10 = vector.broadcast %cst_15 : f32 to vector<16x1xf32>
    %11 = arith.mulf %9, %10 : vector<16x1xf32>
    %12 = arith.mulf %7, %7 : vector<16x128xf32>
    %cst_16 = arith.constant dense<0.000000e+00> : vector<16xf32>
    %13 = vector.multi_reduction <add>, %12, %cst_16 [1] : vector<16x128xf32> to vector<16xf32>
    %14 = vector.shape_cast %13 : vector<16xf32> to vector<16x1xf32>
    %cst_17 = arith.constant 3.125000e-02 : f32
    %15 = vector.broadcast %cst_17 : f32 to vector<16x1xf32>
    %16 = arith.mulf %14, %15 : vector<16x1xf32>
    %17 = arith.mulf %11, %11 : vector<16x1xf32>
    %18 = arith.subf %16, %17 : vector<16x1xf32>
    %cst_18 = arith.constant 0.000000e+00 : f32
    %19 = vector.broadcast %cst_18 : f32 to vector<16x1xf32>
    %20 = arith.maximumf %18, %19 : vector<16x1xf32>
    %cst_19 = arith.constant 9.99999974E-6 : f32
    %21 = vector.broadcast %cst_19 : f32 to vector<16x1xf32>
    %22 = arith.addf %20, %21 : vector<16x1xf32>
    %23 = math.rsqrt %22 : vector<16x1xf32>
    %24 = vector.broadcast %0 : vector<1x128xf32> to vector<16x128xf32>
    %25 = vector.broadcast %23 : vector<16x1xf32> to vector<16x128xf32>
    %26 = arith.mulf %24, %25 : vector<16x128xf32>
    %27 = vector.broadcast %11 : vector<16x1xf32> to vector<16x128xf32>
    %28 = arith.mulf %27, %26 : vector<16x128xf32>
    %29 = vector.broadcast %1 : vector<1x128xf32> to vector<16x128xf32>
    %30 = arith.subf %29, %28 : vector<16x128xf32>
    %31 = arith.mulf %7, %26 : vector<16x128xf32>
    %32 = arith.addf %31, %30 : vector<16x128xf32>
    %cst_20 = arith.constant 5.000000e-01 : f32
    %33 = vector.broadcast %cst_20 : f32 to vector<16x128xf32>
    %34 = arith.mulf %33, %32 : vector<16x128xf32>
    %cst_21 = arith.constant 4.471500e-02 : f32
    %35 = vector.broadcast %cst_21 : f32 to vector<16x128xf32>
    %36 = arith.mulf %35, %32 : vector<16x128xf32>
    %37 = arith.mulf %36, %32 : vector<16x128xf32>
    %38 = arith.mulf %37, %32 : vector<16x128xf32>
    %39 = arith.addf %32, %38 : vector<16x128xf32>
    %cst_22 = arith.constant 0.797884583 : f32
    %40 = vector.broadcast %cst_22 : f32 to vector<16x128xf32>
    %41 = arith.mulf %40, %39 : vector<16x128xf32>
    %42 = math.tanh %41 : vector<16x128xf32>
    %cst_23 = arith.constant 1.000000e+00 : f32
    %43 = vector.broadcast %cst_23 : f32 to vector<16x128xf32>
    %44 = arith.addf %43, %42 : vector<16x128xf32>
    %45 = arith.mulf %34, %44 : vector<16x128xf32>
    %46 = arith.truncf %45 : vector<16x128xf32> to vector<16x128xbf16>
    %cst_24 = arith.constant dense<0.000000e+00> : vector<16x128xf32>
    %47 = tpu.matmul %46, %4, %cst_24 {dimension_numbers = #tpu.dot_dimension_numbers<[1], [0], [0], [1], [0, 0, 1, 1], [], []>} : vector<16x128xbf16>, vector<128x128xbf16>, vector<16x128xf32> -> vector<16x128xf32>
    %cst_25 = arith.constant dense<0.000000e+00> : vector<16xf32>
    %48 = vector.multi_reduction <add>, %47, %cst_25 [1] : vector<16x128xf32> to vector<16xf32>
    %49 = vector.shape_cast %48 : vector<16xf32> to vector<16x1xf32>
    %cst_26 = arith.constant 1.562500e-02 : f32
    %50 = vector.broadcast %cst_26 : f32 to vector<16x1xf32>
    %51 = arith.mulf %49, %50 : vector<16x1xf32>
    %52 = arith.mulf %47, %47 : vector<16x128xf32>
    %cst_27 = arith.constant dense<0.000000e+00> : vector<16xf32>
    %53 = vector.multi_reduction <add>, %52, %cst_27 [1] : vector<16x128xf32> to vector<16xf32>
    %54 = vector.shape_cast %53 : vector<16xf32> to vector<16x1xf32>
    %cst_28 = arith.constant 1.562500e-02 : f32
    %55 = vector.broadcast %cst_28 : f32 to vector<16x1xf32>
    %56 = arith.mulf %54, %55 : vector<16x1xf32>
    %57 = arith.mulf %51, %51 : vector<16x1xf32>
    %58 = arith.subf %56, %57 : vector<16x1xf32>
    %cst_29 = arith.constant 0.000000e+00 : f32
    %59 = vector.broadcast %cst_29 : f32 to vector<16x1xf32>
    %60 = arith.maximumf %58, %59 : vector<16x1xf32>
    %cst_30 = arith.constant 9.99999974E-6 : f32
    %61 = vector.broadcast %cst_30 : f32 to vector<16x1xf32>
    %62 = arith.addf %60, %61 : vector<16x1xf32>
    %63 = math.rsqrt %62 : vector<16x1xf32>
    %64 = vector.broadcast %2 : vector<1x128xf32> to vector<16x128xf32>
    %65 = vector.broadcast %63 : vector<16x1xf32> to vector<16x128xf32>
    %66 = arith.mulf %64, %65 : vector<16x128xf32>
    %67 = vector.broadcast %51 : vector<16x1xf32> to vector<16x128xf32>
    %68 = arith.mulf %67, %66 : vector<16x128xf32>
    %69 = vector.broadcast %3 : vector<1x128xf32> to vector<16x128xf32>
    %70 = arith.subf %69, %68 : vector<16x128xf32>
    %71 = arith.mulf %47, %66 : vector<16x128xf32>
    %72 = arith.addf %71, %70 : vector<16x128xf32>
    %cst_31 = arith.constant 5.000000e-01 : f32
    %73 = vector.broadcast %cst_31 : f32 to vector<16x128xf32>
    %74 = arith.mulf %73, %72 : vector<16x128xf32>
    %cst_32 = arith.constant 4.471500e-02 : f32
    %75 = vector.broadcast %cst_32 : f32 to vector<16x128xf32>
    %76 = arith.mulf %75, %72 : vector<16x128xf32>
    %77 = arith.mulf %76, %72 : vector<16x128xf32>
    %78 = arith.mulf %77, %72 : vector<16x128xf32>
    %79 = arith.addf %72, %78 : vector<16x128xf32>
    %cst_33 = arith.constant 0.797884583 : f32
    %80 = vector.broadcast %cst_33 : f32 to vector<16x128xf32>
    %81 = arith.mulf %80, %79 : vector<16x128xf32>
    %82 = math.tanh %81 : vector<16x128xf32>
    %cst_34 = arith.constant 1.000000e+00 : f32
    %83 = vector.broadcast %cst_34 : f32 to vector<16x128xf32>
    %84 = arith.addf %83, %82 : vector<16x128xf32>
    %85 = arith.mulf %74, %84 : vector<16x128xf32>
    %86 = arith.truncf %85 : vector<16x128xf32> to vector<16x128xbf16>
    %cst_35 = arith.constant dense<0.000000e+00> : vector<16x128xf32>
    %87 = tpu.matmul %86, %5, %cst_35 {dimension_numbers = #tpu.dot_dimension_numbers<[1], [0], [0], [1], [0, 0, 1, 1], [], []>} : vector<16x128xbf16>, vector<128x128xbf16>, vector<16x128xf32> -> vector<16x128xf32>
    %88 = vector.broadcast %6 : vector<1x128xf32> to vector<16x128xf32>
    %89 = arith.addf %87, %88 : vector<16x128xf32>
    %c0_36 = arith.constant 0 : index
    %c0_37 = arith.constant 0 : index
    %90 = vector.load %arg9[%c0_36, %c0_37] : memref<16x128xf32, #tpu.memory_space<vmem>>, vector<16x128xf32>
    tpu.vector_store %arg9[%c0_36, %c0_37], %89 {strides = array<i32>} : memref<16x128xf32, #tpu.memory_space<vmem>>, vector<16x128xf32>,
    return
  }
  func.func @transform_0(%arg0: i32) -> (i32, i32) {
    %c0_i32 = arith.constant 0 : i32
    %c0_i32_0 = arith.constant 0 : i32
    return %arg0, %c0_i32 : i32, i32
  }
  func.func @transform_1(%arg0: i32) -> (i32, i32) {
    %c0_i32 = arith.constant 0 : i32
    %c0_i32_0 = arith.constant 0 : i32
    %c0_i32_1 = arith.constant 0 : i32
    return %c0_i32, %c0_i32_0 : i32, i32
  }
  func.func @transform_2(%arg0: i32) -> (i32, i32) {
    %c0_i32 = arith.constant 0 : i32
    %c0_i32_0 = arith.constant 0 : i32
    %c0_i32_1 = arith.constant 0 : i32
    return %c0_i32, %c0_i32_0 : i32, i32
  }
  func.func @transform_3(%arg0: i32) -> (i32, i32) {
    %c0_i32 = arith.constant 0 : i32
    %c0_i32_0 = arith.constant 0 : i32
    %c0_i32_1 = arith.constant 0 : i32
    return %c0_i32, %c0_i32_0 : i32, i32
  }
  func.func @transform_4(%arg0: i32) -> (i32, i32) {
    %c0_i32 = arith.constant 0 : i32
    %c0_i32_0 = arith.constant 0 : i32
    %c0_i32_1 = arith.constant 0 : i32
    return %c0_i32, %c0_i32_0 : i32, i32
  }
  func.func @transform_5(%arg0: i32) -> (i32, i32) {
    %c0_i32 = arith.constant 0 : i32
    %c0_i32_0 = arith.constant 0 : i32
    %c0_i32_1 = arith.constant 0 : i32
    return %c0_i32, %c0_i32_0 : i32, i32
  }
  func.func @transform_6(%arg0: i32) -> (i32, i32) {
    %c0_i32 = arith.constant 0 : i32
    %c0_i32_0 = arith.constant 0 : i32
    %c0_i32_1 = arith.constant 0 : i32
    return %c0_i32, %c0_i32_0 : i32, i32
  }
  func.func @transform_7(%arg0: i32) -> (i32, i32) {
    %c0_i32 = arith.constant 0 : i32
    %c0_i32_0 = arith.constant 0 : i32
    %c0_i32_1 = arith.constant 0 : i32
    return %c0_i32, %c0_i32_0 : i32, i32
  }
  func.func @transform_8(%arg0: i32) -> (i32, i32) {
    %c0_i32 = arith.constant 0 : i32
    %c0_i32_0 = arith.constant 0 : i32
    return %arg0, %c0_i32 : i32, i32
  }
}

module attributes {stable_mosaic.version = 11 : i64} {
  func.func @kernel(%arg0: i32, %arg1: memref<16x128xf32, #tpu.memory_space<vmem>>, %arg2: memref<1x128xf32, #tpu.memory_space<vmem>>, %arg3: memref<1x128xf32, #tpu.memory_space<vmem>>, %arg4: memref<128x128xbf16, #tpu.memory_space<vmem>>, %arg5: memref<1x128xf32, #tpu.memory_space<vmem>>, %arg6: memref<1x128xf32, #tpu.memory_space<vmem>>, %arg7: memref<128x128xbf16, #tpu.memory_space<vmem>>, %arg8: memref<1x128xf32, #tpu.memory_space<vmem>>, %arg9: memref<16x128xf32, #tpu.memory_space<vmem>>) attributes {dimension_semantics = [#tpu.dimension_semantics<parallel>], iteration_bounds = array<i64: 1>, scalar_prefetch = 0 : i64, scratch_operands = 0 : i64, tpu.core_type = #tpu.core_type<tc>, window_params = [{transform_indices = @transform_0, window_bounds = array<i64: 16, 128>}, {pipeline_mode = #tpu.pipeline_mode<synchronous>, transform_indices = @transform_1, window_bounds = array<i64: 1, 128>}, {pipeline_mode = #tpu.pipeline_mode<synchronous>, transform_indices = @transform_2, window_bounds = array<i64: 1, 128>}, {pipeline_mode = #tpu.pipeline_mode<synchronous>, transform_indices = @transform_3, window_bounds = array<i64: 128, 128>}, {pipeline_mode = #tpu.pipeline_mode<synchronous>, transform_indices = @transform_4, window_bounds = array<i64: 1, 128>}, {pipeline_mode = #tpu.pipeline_mode<synchronous>, transform_indices = @transform_5, window_bounds = array<i64: 1, 128>}, {pipeline_mode = #tpu.pipeline_mode<synchronous>, transform_indices = @transform_6, window_bounds = array<i64: 128, 128>}, {pipeline_mode = #tpu.pipeline_mode<synchronous>, transform_indices = @transform_7, window_bounds = array<i64: 1, 128>}, {transform_indices = @transform_8, window_bounds = array<i64: 16, 128>}]} {
    %c0 = arith.constant 0 : index
    %c0_0 = arith.constant 0 : index
    %0 = vector.load %arg2[%c0, %c0_0] : memref<1x128xf32, #tpu.memory_space<vmem>>, vector<1x128xf32>
    %c0_1 = arith.constant 0 : index
    %c0_2 = arith.constant 0 : index
    %1 = vector.load %arg3[%c0_1, %c0_2] : memref<1x128xf32, #tpu.memory_space<vmem>>, vector<1x128xf32>
    %c0_3 = arith.constant 0 : index
    %c0_4 = arith.constant 0 : index
    %2 = vector.load %arg5[%c0_3, %c0_4] : memref<1x128xf32, #tpu.memory_space<vmem>>, vector<1x128xf32>
    %c0_5 = arith.constant 0 : index
    %c0_6 = arith.constant 0 : index
    %3 = vector.load %arg6[%c0_5, %c0_6] : memref<1x128xf32, #tpu.memory_space<vmem>>, vector<1x128xf32>
    %c0_7 = arith.constant 0 : index
    %c0_8 = arith.constant 0 : index
    %4 = vector.load %arg4[%c0_7, %c0_8] : memref<128x128xbf16, #tpu.memory_space<vmem>>, vector<128x128xbf16>
    %c0_9 = arith.constant 0 : index
    %c0_10 = arith.constant 0 : index
    %5 = vector.load %arg7[%c0_9, %c0_10] : memref<128x128xbf16, #tpu.memory_space<vmem>>, vector<128x128xbf16>
    %c0_11 = arith.constant 0 : index
    %c0_12 = arith.constant 0 : index
    %6 = vector.load %arg8[%c0_11, %c0_12] : memref<1x128xf32, #tpu.memory_space<vmem>>, vector<1x128xf32>
    %c0_13 = arith.constant 0 : index
    %c0_14 = arith.constant 0 : index
    %7 = vector.load %arg1[%c0_13, %c0_14] : memref<16x128xf32, #tpu.memory_space<vmem>>, vector<16x128xf32>
    %cst = arith.constant dense<0.000000e+00> : vector<16xf32>
    %8 = vector.multi_reduction <add>, %7, %cst [1] : vector<16x128xf32> to vector<16xf32>
    %9 = vector.shape_cast %8 : vector<16xf32> to vector<16x1xf32>
    %cst_15 = arith.constant 3.125000e-02 : f32
    %10 = vector.broadcast %cst_15 : f32 to vector<16x1xf32>
    %11 = arith.mulf %9, %10 : vector<16x1xf32>
    %12 = arith.mulf %7, %7 : vector<16x128xf32>
    %cst_16 = arith.constant dense<0.000000e+00> : vector<16xf32>
    %13 = vector.multi_reduction <add>, %12, %cst_16 [1] : vector<16x128xf32> to vector<16xf32>
    %14 = vector.shape_cast %13 : vector<16xf32> to vector<16x1xf32>
    %cst_17 = arith.constant 3.125000e-02 : f32
    %15 = vector.broadcast %cst_17 : f32 to vector<16x1xf32>
    %16 = arith.mulf %14, %15 : vector<16x1xf32>
    %17 = arith.mulf %11, %11 : vector<16x1xf32>
    %18 = arith.subf %16, %17 : vector<16x1xf32>
    %cst_18 = arith.constant 0.000000e+00 : f32
    %19 = vector.broadcast %cst_18 : f32 to vector<16x1xf32>
    %20 = arith.maximumf %18, %19 : vector<16x1xf32>
    %cst_19 = arith.constant 9.99999974E-6 : f32
    %21 = vector.broadcast %cst_19 : f32 to vector<16x1xf32>
    %22 = arith.addf %20, %21 : vector<16x1xf32>
    %23 = math.rsqrt %22 : vector<16x1xf32>
    %24 = vector.broadcast %0 : vector<1x128xf32> to vector<16x128xf32>
    %25 = vector.broadcast %23 : vector<16x1xf32> to vector<16x128xf32>
    %26 = arith.mulf %24, %25 : vector<16x128xf32>
    %27 = vector.broadcast %11 : vector<16x1xf32> to vector<16x128xf32>
    %28 = arith.mulf %27, %26 : vector<16x128xf32>
    %29 = vector.broadcast %1 : vector<1x128xf32> to vector<16x128xf32>
    %30 = arith.subf %29, %28 : vector<16x128xf32>
    %31 = arith.mulf %7, %26 : vector<16x128xf32>
    %32 = arith.addf %31, %30 : vector<16x128xf32>
    %cst_20 = arith.constant 5.000000e-01 : f32
    %33 = vector.broadcast %cst_20 : f32 to vector<16x128xf32>
    %34 = arith.mulf %33, %32 : vector<16x128xf32>
    %cst_21 = arith.constant 4.471500e-02 : f32
    %35 = vector.broadcast %cst_21 : f32 to vector<16x128xf32>
    %36 = arith.mulf %35, %32 : vector<16x128xf32>
    %37 = arith.mulf %36, %32 : vector<16x128xf32>
    %38 = arith.mulf %37, %32 : vector<16x128xf32>
    %39 = arith.addf %32, %38 : vector<16x128xf32>
    %cst_22 = arith.constant 0.797884583 : f32
    %40 = vector.broadcast %cst_22 : f32 to vector<16x128xf32>
    %41 = arith.mulf %40, %39 : vector<16x128xf32>
    %42 = math.tanh %41 : vector<16x128xf32>
    %cst_23 = arith.constant 1.000000e+00 : f32
    %43 = vector.broadcast %cst_23 : f32 to vector<16x128xf32>
    %44 = arith.addf %43, %42 : vector<16x128xf32>
    %45 = arith.mulf %34, %44 : vector<16x128xf32>
    %46 = arith.truncf %45 : vector<16x128xf32> to vector<16x128xbf16>
    %cst_24 = arith.constant dense<0.000000e+00> : vector<16x128xf32>
    %47 = tpu.matmul %46, %4, %cst_24 {dimension_numbers = #tpu.dot_dimension_numbers<[1], [0], [0], [1], [0, 0, 1, 1], [], []>} : vector<16x128xbf16>, vector<128x128xbf16>, vector<16x128xf32> -> vector<16x128xf32>
    %cst_25 = arith.constant dense<0.000000e+00> : vector<16xf32>
    %48 = vector.multi_reduction <add>, %47, %cst_25 [1] : vector<16x128xf32> to vector<16xf32>
    %49 = vector.shape_cast %48 : vector<16xf32> to vector<16x1xf32>
    %cst_26 = arith.constant 1.562500e-02 : f32
    %50 = vector.broadcast %cst_26 : f32 to vector<16x1xf32>
    %51 = arith.mulf %49, %50 : vector<16x1xf32>
    %52 = arith.mulf %47, %47 : vector<16x128xf32>
    %cst_27 = arith.constant dense<0.000000e+00> : vector<16xf32>
    %53 = vector.multi_reduction <add>, %52, %cst_27 [1] : vector<16x128xf32> to vector<16xf32>
    %54 = vector.shape_cast %53 : vector<16xf32> to vector<16x1xf32>
    %cst_28 = arith.constant 1.562500e-02 : f32
    %55 = vector.broadcast %cst_28 : f32 to vector<16x1xf32>
    %56 = arith.mulf %54, %55 : vector<16x1xf32>
    %57 = arith.mulf %51, %51 : vector<16x1xf32>
    %58 = arith.subf %56, %57 : vector<16x1xf32>
    %cst_29 = arith.constant 0.000000e+00 : f32
    %59 = vector.broadcast %cst_29 : f32 to vector<16x1xf32>
    %60 = arith.maximumf %58, %59 : vector<16x1xf32>
    %cst_30 = arith.constant 9.99999974E-6 : f32
    %61 = vector.broadcast %cst_30 : f32 to vector<16x1xf32>
    %62 = arith.addf %60, %61 : vector<16x1xf32>
    %63 = math.rsqrt %62 : vector<16x1xf32>
    %64 = vector.broadcast %2 : vector<1x128xf32> to vector<16x128xf32>
    %65 = vector.broadcast %63 : vector<16x1xf32> to vector<16x128xf32>
    %66 = arith.mulf %64, %65 : vector<16x128xf32>
    %67 = vector.broadcast %51 : vector<16x1xf32> to vector<16x128xf32>
    %68 = arith.mulf %67, %66 : vector<16x128xf32>
    %69 = vector.broadcast %3 : vector<1x128xf32> to vector<16x128xf32>
    %70 = arith.subf %69, %68 : vector<16x128xf32>
    %71 = arith.mulf %47, %66 : vector<16x128xf32>
    %72 = arith.addf %71, %70 : vector<16x128xf32>
    %cst_31 = arith.constant 5.000000e-01 : f32
    %73 = vector.broadcast %cst_31 : f32 to vector<16x128xf32>
    %74 = arith.mulf %73, %72 : vector<16x128xf32>
    %cst_32 = arith.constant 4.471500e-02 : f32
    %75 = vector.broadcast %cst_32 : f32 to vector<16x128xf32>
    %76 = arith.mulf %75, %72 : vector<16x128xf32>
    %77 = arith.mulf %76, %72 : vector<16x128xf32>
    %78 = arith.mulf %77, %72 : vector<16x128xf32>
    %79 = arith.addf %72, %78 : vector<16x128xf32>
    %cst_33 = arith.constant 0.797884583 : f32
    %80 = vector.broadcast %cst_33 : f32 to vector<16x128xf32>
    %81 = arith.mulf %80, %79 : vector<16x128xf32>
    %82 = math.tanh %81 : vector<16x128xf32>
    %cst_34 = arith.constant 1.000000e+00 : f32
    %83 = vector.broadcast %cst_34 : f32 to vector<16x128xf32>
    %84 = arith.addf %83, %82 : vector<16x128xf32>
    %85 = arith.mulf %74, %84 : vector<16x128xf32>
    %86 = arith.truncf %85 : vector<16x128xf32> to vector<16x128xbf16>
    %cst_35 = arith.constant dense<0.000000e+00> : vector<16x128xf32>
    %87 = tpu.matmul %86, %5, %cst_35 {dimension_numbers = #tpu.dot_dimension_numbers<[1], [0], [0], [1], [0, 0, 1, 1], [], []>} : vector<16x128xbf16>, vector<128x128xbf16>, vector<16x128xf32> -> vector<16x128xf32>
    %88 = vector.broadcast %6 : vector<1x128xf32> to vector<16x128xf32>
    %89 = arith.addf %87, %88 : vector<16x128xf32>
    %c0_36 = arith.constant 0 : index
    %c0_37 = arith.constant 0 : index
    %90 = vector.load %arg9[%c0_36, %c0_37] : memref<16x128xf32, #tpu.memory_space<vmem>>, vector<16x128xf32>
    tpu.vector_store %arg9[%c0_36, %c0_37], %89 {strides = array<i32>} : memref<16x128xf32, #tpu.memory_space<vmem>>, vector<16x128xf32>,
    return
  }
  func.func @transform_0(%arg0: i32) -> (i32, i32) {
    %c0_i32 = arith.constant 0 : i32
    %c0_i32_0 = arith.constant 0 : i32
    return %arg0, %c0_i32 : i32, i32
  }
  func.func @transform_1(%arg0: i32) -> (i32, i32) {
    %c0_i32 = arith.constant 0 : i32
    %c0_i32_0 = arith.constant 0 : i32
    %c0_i32_1 = arith.constant 0 : i32
    return %c0_i32, %c0_i32_0 : i32, i32
  }
  func.func @transform_2(%arg0: i32) -> (i32, i32) {
    %c0_i32 = arith.constant 0 : i32
    %c0_i32_0 = arith.constant 0 : i32
    %c0_i32_1 = arith.constant 0 : i32
    return %c0_i32, %c0_i32_0 : i32, i32
  }
  func.func @transform_3(%arg0: i32) -> (i32, i32) {
    %c0_i32 = arith.constant 0 : i32
    %c0_i32_0 = arith.constant 0 : i32
    %c0_i32_1 = arith.constant 0 : i32
    return %c0_i32, %c0_i32_0 : i32, i32
  }
  func.func @transform_4(%arg0: i32) -> (i32, i32) {
    %c0_i32 = arith.constant 0 : i32
    %c0_i32_0 = arith.constant 0 : i32
    %c0_i32_1 = arith.constant 0 : i32
    return %c0_i32, %c0_i32_0 : i32, i32
  }
  func.func @transform_5(%arg0: i32) -> (i32, i32) {
    %c0_i32 = arith.constant 0 : i32
    %c0_i32_0 = arith.constant 0 : i32
    %c0_i32_1 = arith.constant 0 : i32
    return %c0_i32, %c0_i32_0 : i32, i32
  }
  func.func @transform_6(%arg0: i32) -> (i32, i32) {
    %c0_i32 = arith.constant 0 : i32
    %c0_i32_0 = arith.constant 0 : i32
    %c0_i32_1 = arith.constant 0 : i32
    return %c0_i32, %c0_i32_0 : i32, i32
  }
  func.func @transform_7(%arg0: i32) -> (i32, i32) {
    %c0_i32 = arith.constant 0 : i32
    %c0_i32_0 = arith.constant 0 : i32
    %c0_i32_1 = arith.constant 0 : i32
    return %c0_i32, %c0_i32_0 : i32, i32
  }
  func.func @transform_8(%arg0: i32) -> (i32, i32) {
    %c0_i32 = arith.constant 0 : i32
    %c0_i32_0 = arith.constant 0 : i32
    return %arg0, %c0_i32 : i32, i32
  }
}

</mosaic_0001>

<llo_original>
// kernel: tpu_custom_call.1
$region0: #{tpu_custom_call.1}
  #allocation0 [shape = 'u32[]', space=smem, size = 0x4, offset = 0x4, fixed_abs, tag = 'smem constant byte address 0x4 - core index']
  #allocation1 [shape = 'u32[144,128]{1,0:T(1,128)}', space=vmem, size = 0x12000, scoped, tag = 'internal scratch']
  %s0 = inlined_call_operand.hbm [shape: f32[16,128], index: 0, kind: input, shape index: {}]
  %s1 = inlined_call_operand.vmem [shape: f32[1,128], index: 1, kind: input, shape index: {}]
  %s2 = inlined_call_operand.vmem [shape: f32[1,128], index: 2, kind: input, shape index: {}]
  %s3 = inlined_call_operand.hbm [shape: bf16[128,128], index: 3, kind: input, shape index: {}]
  %s4 = inlined_call_operand.vmem [shape: f32[1,128], index: 4, kind: input, shape index: {}]
  %s5 = inlined_call_operand.vmem [shape: f32[1,128], index: 5, kind: input, shape index: {}]
  %s6 = inlined_call_operand.hbm [shape: bf16[128,128], index: 6, kind: input, shape index: {}]
  %s7 = inlined_call_operand.vmem [shape: f32[1,128], index: 7, kind: input, shape index: {}]
  %s8 = inlined_call_operand.hbm [shape: f32[16,128], index: 8, kind: output, shape index: {}]
  %s9 = sld [smem:[#allocation0]]
  $region54: #{tpu_custom_call.1} parent=0
    _
  %s11 = ssub.s32 1, %s9
  %s12 = scalar_select 0, %s11, %s9
  $region1: #{tpu_custom_call.1} parent=0
    #allocation2 [shape = 'u8[8192]{0}', space=vmem, size = 0x2000, scoped, tag = 'input window, operand 0, single buffered']
    #allocation3 [shape = 's32[1]{0}', space=sflag, size = 0x4, scoped, tag = 'scoped memory for tpu_custom_call.1']
    #allocation4 [shape = 's32[1]{0}', space=sflag, size = 0x4, scoped, tag = 'scoped memory for tpu_custom_call.1']
    #allocation5 [shape = 'u8[32768]{0}', space=vmem, size = 0x8000, scoped, tag = 'input window, operand 3, single buffered']
    #allocation6 [shape = 's32[1]{0}', space=sflag, size = 0x4, scoped, tag = 'scoped memory for tpu_custom_call.1']
    #allocation7 [shape = 'u8[32768]{0}', space=vmem, size = 0x8000, scoped, tag = 'input window, operand 6, single buffered']
    #allocation8 [shape = 'u8[8192]{0}', space=vmem, size = 0x2000, scoped, tag = 'output window, operand 0, single buffered']
    %13 = vsyncpa [#allocation3], 0
    %14 = vsyncpa [#allocation6], 0
    %15 = vsyncpa [#allocation4], 0
    // Predicated region
    $region2: #{tpu_custom_call.1} parent=1 // pred_check
      _
    $region3: #{tpu_custom_call.1} parent=1 // pred_check_branch
      %17 = sbr.rel (0) target = $region5
    $region4: #{tpu_custom_call.1} parent=1 // pred_region
      %s19 = ssub.s32 256, 256
      %20 = vsyncadd [#allocation3], %s19
      %s21 = sshll.u32 [#allocation2], 4
      %s22 = int_to_ptr.vmem [resolvable:$true] %s21
      %27 = dma.hbm_to_vmem [thread:$0]  %s0, 256, %s22, [#allocation3], 128, 128, 8
    $region5: #{tpu_custom_call.1} parent=1 // pred_fallthru
      _
    // Predicated region
    $region6: #{tpu_custom_call.1} parent=1 // pred_check
      _
    $region7: #{tpu_custom_call.1} parent=1 // pred_check_branch
      %29 = sbr.rel (0) target = $region9
    $region8: #{tpu_custom_call.1} parent=1 // pred_region
      _
    $region9: #{tpu_custom_call.1} parent=1 // pred_fallthru
      _
    // Predicated region
    $region10: #{tpu_custom_call.1} parent=1 // pred_check
      _
    $region11: #{tpu_custom_call.1} parent=1 // pred_check_branch
      %31 = sbr.rel (0) target = $region13
    $region12: #{tpu_custom_call.1} parent=1 // pred_region
      _
    $region13: #{tpu_custom_call.1} parent=1 // pred_fallthru
      _
    // Predicated region
    $region14: #{tpu_custom_call.1} parent=1 // pred_check
      _
    $region15: #{tpu_custom_call.1} parent=1 // pred_check_branch
      %33 = sbr.rel (0) target = $region17
    $region16: #{tpu_custom_call.1} parent=1 // pred_region
      %s35 = ssub.s32 1024, 1024
      %36 = vsyncadd [#allocation6], %s35
      %s37 = sshll.u32 [#allocation5], 4
      %s38 = int_to_ptr.vmem [resolvable:$true] %s37
      %43 = dma.hbm_to_vmem [thread:$0]  %s3, 1024, %s38, [#allocation6], 64, 64, 4
    $region17: #{tpu_custom_call.1} parent=1 // pred_fallthru
      _
    // Predicated region
    $region18: #{tpu_custom_call.1} parent=1 // pred_check
      _
    $region19: #{tpu_custom_call.1} parent=1 // pred_check_branch
      %45 = sbr.rel (0) target = $region21
    $region20: #{tpu_custom_call.1} parent=1 // pred_region
      _
    $region21: #{tpu_custom_call.1} parent=1 // pred_fallthru
      _
    // Predicated region
    $region22: #{tpu_custom_call.1} parent=1 // pred_check
      _
    $region23: #{tpu_custom_call.1} parent=1 // pred_check_branch
      %47 = sbr.rel (0) target = $region25
    $region24: #{tpu_custom_call.1} parent=1 // pred_region
      _
    $region25: #{tpu_custom_call.1} parent=1 // pred_fallthru
      _
    // Predicated region
    $region26: #{tpu_custom_call.1} parent=1 // pred_check
      _
    $region27: #{tpu_custom_call.1} parent=1 // pred_check_branch
      %49 = sbr.rel (0) target = $region29
    $region28: #{tpu_custom_call.1} parent=1 // pred_region
      %s51 = ssub.s32 1024, 1024
      %52 = vsyncadd [#allocation6], %s51
      %s53 = sshll.u32 [#allocation7], 4
      %s54 = int_to_ptr.vmem [resolvable:$true] %s53
      %59 = dma.hbm_to_vmem [thread:$0]  %s6, 1024, %s54, [#allocation6], 64, 64, 4
    $region29: #{tpu_custom_call.1} parent=1 // pred_fallthru
      _
    // Predicated region
    $region30: #{tpu_custom_call.1} parent=1 // pred_check
      _
    $region31: #{tpu_custom_call.1} parent=1 // pred_check_branch
      %61 = sbr.rel (0) target = $region33
    $region32: #{tpu_custom_call.1} parent=1 // pred_region
      _
    $region33: #{tpu_custom_call.1} parent=1 // pred_fallthru
      _
    // Predicated region
    $region34: #{tpu_custom_call.1} parent=1 // pred_check
      _
    $region35: #{tpu_custom_call.1} parent=1 // pred_check_branch
      %63 = sbr.rel (0) target = $region37
    $region36: #{tpu_custom_call.1} parent=1 // pred_region
      %64 = dma.done [#allocation3], 256
    $region37: #{tpu_custom_call.1} parent=1 // pred_fallthru
      _
    // Predicated region
    $region38: #{tpu_custom_call.1} parent=1 // pred_check
      _
    $region39: #{tpu_custom_call.1} parent=1 // pred_check_branch
      %66 = sbr.rel (0) target = $region41
    $region40: #{tpu_custom_call.1} parent=1 // pred_region
      %67 = dma.done [#allocation6], 1024
    $region41: #{tpu_custom_call.1} parent=1 // pred_fallthru
      _
    // Predicated region
    $region42: #{tpu_custom_call.1} parent=1 // pred_check
      _
    $region43: #{tpu_custom_call.1} parent=1 // pred_check_branch
      %69 = sbr.rel (0) target = $region45
    $region44: #{tpu_custom_call.1} parent=1 // pred_region
      %70 = dma.done [#allocation6], 1024
    $region45: #{tpu_custom_call.1} parent=1 // pred_fallthru
      _
    %v72 = vld [vmem:[%s1] sm:$0x1]
    %v73 = vld [vmem:[%s2] sm:$0x1]
    %v74 = vld [vmem:[%s4] sm:$0x1]
    %v75 = vld [vmem:[%s5] sm:$0x1]
    %v76 = vld [vmem:[#allocation5] sm:$0xf]
    %v77 = vld [vmem:[#allocation5 + $0x4] sm:$0xf]
    %v78 = vld [vmem:[#allocation5 + $0x8] sm:$0xf]
    %v79 = vld [vmem:[#allocation5 + $0xc] sm:$0xf]
    %v80 = vld [vmem:[#allocation5 + $0x10] sm:$0xf]
    %v81 = vld [vmem:[#allocation5 + $0x14] sm:$0xf]
    %v82 = vld [vmem:[#allocation5 + $0x18] sm:$0xf]
    %v83 = vld [vmem:[#allocation5 + $0x1c] sm:$0xf]
    %v84 = vld [vmem:[#allocation5 + $0x20] sm:$0xf]
    %v85 = vld [vmem:[#allocation5 + $0x24] sm:$0xf]
    %v86 = vld [vmem:[#allocation5 + $0x28] sm:$0xf]
    %v87 = vld [vmem:[#allocation5 + $0x2c] sm:$0xf]
    %v88 = vld [vmem:[#allocation5 + $0x30] sm:$0xf]
    %v89 = vld [vmem:[#allocation5 + $0x34] sm:$0xf]
    %v90 = vld [vmem:[#allocation5 + $0x38] sm:$0xf]
    %v91 = vld [vmem:[#allocation5 + $0x3c] sm:$0xf]
    %v92 = vld [vmem:[#allocation7] sm:$0xf]
    %v93 = vld [vmem:[#allocation7 + $0x4] sm:$0xf]
    %v94 = vld [vmem:[#allocation7 + $0x8] sm:$0xf]
    %v95 = vld [vmem:[#allocation7 + $0xc] sm:$0xf]
    %v96 = vld [vmem:[#allocation7 + $0x10] sm:$0xf]
    %v97 = vld [vmem:[#allocation7 + $0x14] sm:$0xf]
    %v98 = vld [vmem:[#allocation7 + $0x18] sm:$0xf]
    %v99 = vld [vmem:[#allocation7 + $0x1c] sm:$0xf]
    %v100 = vld [vmem:[#allocation7 + $0x20] sm:$0xf]
    %v101 = vld [vmem:[#allocation7 + $0x24] sm:$0xf]
    %v102 = vld [vmem:[#allocation7 + $0x28] sm:$0xf]
    %v103 = vld [vmem:[#allocation7 + $0x2c] sm:$0xf]
    %v104 = vld [vmem:[#allocation7 + $0x30] sm:$0xf]
    %v105 = vld [vmem:[#allocation7 + $0x34] sm:$0xf]
    %v106 = vld [vmem:[#allocation7 + $0x38] sm:$0xf]
    %v107 = vld [vmem:[#allocation7 + $0x3c] sm:$0xf]
    %v108 = vld [vmem:[%s7] sm:$0x1]
    %v109 = vld [vmem:[#allocation2] sm:$0xff]
    %v110 = vld [vmem:[#allocation2 + $0x8] sm:$0xff]
    %111 = vadd.xlane.f32.xlu0 %v109
    %v112 = vpop.xlane.xlu0 %111
    %113 = vadd.xlane.f32.xlu0 %v110
    %v114 = vpop.xlane.xlu0 %113
    %v115 = vmul.f32 %v112, 0.03125
    %v116 = vmul.f32 %v114, 0.03125
    %v117 = vmul.f32 %v109, %v109
    %v118 = vmul.f32 %v110, %v110
    %119 = vadd.xlane.f32.xlu0 %v117
    %v120 = vpop.xlane.xlu0 %119
    %121 = vadd.xlane.f32.xlu0 %v118
    %v122 = vpop.xlane.xlu0 %121
    %v123 = vmul.f32 %v120, 0.03125
    %v124 = vmul.f32 %v122, 0.03125
    %v125 = vmul.f32 %v115, %v115
    %v126 = vmul.f32 %v116, %v116
    %v127 = vsub.f32 %v123, %v125
    %v128 = vsub.f32 %v124, %v126
    %v129 = vmax.f32 %v127, 0.0
    %v130 = vmax.f32 %v128, 0.0
    %v131 = vadd.f32 %v129, 1e-05
    %v132 = vadd.f32 %v130, 1e-05
    %v133 = vrsqrt.pop %v131
    %v134 = vrsqrt.pop %v132
    %v136 = vlaneseq
    %v137 = vshrl.u32 %v136, 7
    %v138 = vsub.s32 0, %v137
    %v139 = vrot.slane %v72, %v138
    %v141 = vmul.f32 %v139, %v133
    %v142 = vmul.f32 %v139, %v134
    %v143 = vmul.f32 %v115, %v141
    %v144 = vmul.f32 %v116, %v142
    %v146 = vlaneseq
    %v147 = vshrl.u32 %v146, 7
    %v148 = vsub.s32 0, %v147
    %v149 = vrot.slane %v73, %v148
    %v151 = vsub.f32 %v149, %v143
    %v152 = vsub.f32 %v149, %v144
    %v153 = vmul.f32 %v109, %v141
    %v154 = vmul.f32 %v110, %v142
    %v155 = vadd.f32 %v153, %v151
    %v156 = vadd.f32 %v154, %v152
    %v157 = vmul.f32 %v155, 0.5
    %v158 = vmul.f32 %v156, 0.5
    %v159 = vmul.f32 %v155, 0.044715
    %v160 = vmul.f32 %v156, 0.044715
    %v161 = vmul.f32 %v159, %v155
    %v162 = vmul.f32 %v160, %v156
    %v163 = vmul.f32 %v161, %v155
    %v164 = vmul.f32 %v162, %v156
    %v165 = vadd.f32 %v155, %v163
    %v166 = vadd.f32 %v156, %v164
    %v167 = vmul.f32 %v165, 0.7978846
    %v168 = vmul.f32 %v166, 0.7978846
    %v169 = vtanh.pop %v167
    %v170 = vtanh.pop %v168
    %v171 = vadd.f32 %v169, 1.0
    %v172 = vadd.f32 %v170, 1.0
    %v173 = vmul.f32 %v157, %v171
    %v174 = vmul.f32 %v158, %v172
    %v175 = vpack.c.bf16 %v174, %v173
    %v192 = vunpack.c.l.b16 %v76
    %v193 = vunpack.c.l.b16 %v77
    %v194 = vunpack.c.l.b16 %v78
    %v195 = vunpack.c.l.b16 %v79
    %v196 = vunpack.c.l.b16 %v80
    %v197 = vunpack.c.l.b16 %v81
    %v198 = vunpack.c.l.b16 %v82
    %v199 = vunpack.c.l.b16 %v83
    %v200 = vunpack.c.l.b16 %v84
    %v201 = vunpack.c.l.b16 %v85
    %v202 = vunpack.c.l.b16 %v86
    %v203 = vunpack.c.l.b16 %v87
    %v204 = vunpack.c.l.b16 %v88
    %v205 = vunpack.c.l.b16 %v89
    %v206 = vunpack.c.l.b16 %v90
    %v207 = vunpack.c.l.b16 %v91
    %v208 = vpack.c.b16 %v193, %v192
    %v209 = vpack.c.b16 %v195, %v194
    %v210 = vpack.c.b16 %v197, %v196
    %v211 = vpack.c.b16 %v199, %v198
    %v212 = vpack.c.b16 %v201, %v200
    %v213 = vpack.c.b16 %v203, %v202
    %v214 = vpack.c.b16 %v205, %v204
    %v215 = vpack.c.b16 %v207, %v206
    %224 = vmatprep.subr.bf16.mxu0 0
    %225 = vmatpush1.bf16.msra.mxu0 %v215
    %226 = vmatprep.subr.bf16.mxu0 0
    %227 = vmatpush1.bf16.msra.mxu0 %v214
    %228 = vmatprep.subr.bf16.mxu0 0
    %229 = vmatpush1.bf16.msra.mxu0 %v213
    %230 = vmatprep.subr.bf16.mxu0 0
    %231 = vmatpush1.bf16.msra.mxu0 %v212
    %232 = vmatprep.subr.bf16.mxu0 0
    %233 = vmatpush1.bf16.msra.mxu0 %v211
    %234 = vmatprep.subr.bf16.mxu0 0
    %235 = vmatpush1.bf16.msra.mxu0 %v210
    %236 = vmatprep.subr.bf16.mxu0 0
    %237 = vmatpush1.bf16.msra.mxu0 %v209
    %238 = vmatprep.subr.bf16.mxu0 0
    %239 = vmatpush1.bf16.msra.mxu0 %v208
    %240 = vmatprep.subr.bf16.mxu0 0
    %241 = vmatpush2.bf16.msra.mxu0 0
    %242 = vmatprep.subr.bf16.mxu0 0
    %243 = vmatpush2.bf16.msra.mxu0 0
    %244 = vmatprep.subr.bf16.mxu0 0
    %245 = vmatpush2.bf16.msra.mxu0 0
    %246 = vmatprep.subr.bf16.mxu0 0
    %247 = vmatpush2.bf16.msra.mxu0 0
    %248 = vmatprep.subr.bf16.mxu0 0
    %249 = vmatpush2.bf16.msra.mxu0 0
    %250 = vmatprep.subr.bf16.mxu0 0
    %251 = vmatpush2.bf16.msra.mxu0 0
    %252 = vmatprep.subr.bf16.mxu0 0
    %253 = vmatpush2.bf16.msra.mxu0 0
    %254 = vmatprep.subr.bf16.mxu0 0
    %255 = vmatpush2.bf16.msra.mxu0 0
    %256 = vmatprep.mubr.bf16.mxu0 0
    %257 = vmatmul.mubr.bf16.gmra.mxu0 %v175
    %v258 = vpop.f32.mrf.mxu0
    %v259 = vadd.f32 0.0, %v258
    %v260 = vpop.f32.mrf.mxu0
    %v261 = vpop.f32.mrf.mxu0
    %v262 = vadd.f32 0.0, %v261
    %v263 = vpop.f32.mrf.mxu0
    %264 = vdwg.mxu0
    %265 = vadd.xlane.f32.xlu0 %v259
    %v266 = vpop.xlane.xlu0 %265
    %267 = vadd.xlane.f32.xlu0 %v262
    %v268 = vpop.xlane.xlu0 %267
    %v269 = vmul.f32 %v266, 0.015625
    %v270 = vmul.f32 %v268, 0.015625
    %v271 = vmul.f32 %v259, %v259
    %v272 = vmul.f32 %v262, %v262
    %273 = vadd.xlane.f32.xlu0 %v271
    %v274 = vpop.xlane.xlu0 %273
    %275 = vadd.xlane.f32.xlu0 %v272
    %v276 = vpop.xlane.xlu0 %275
    %v277 = vmul.f32 %v274, 0.015625
    %v278 = vmul.f32 %v276, 0.015625
    %v279 = vmul.f32 %v269, %v269
    %v280 = vmul.f32 %v270, %v270
    %v281 = vsub.f32 %v277, %v279
    %v282 = vsub.f32 %v278, %v280
    %v283 = vmax.f32 %v281, 0.0
    %v284 = vmax.f32 %v282, 0.0
    %v285 = vadd.f32 %v283, 1e-05
    %v286 = vadd.f32 %v284, 1e-05
    %v287 = vrsqrt.pop %v285
    %v288 = vrsqrt.pop %v286
    %v290 = vlaneseq
    %v291 = vshrl.u32 %v290, 7
    %v292 = vsub.s32 0, %v291
    %v293 = vrot.slane %v74, %v292
    %v295 = vmul.f32 %v293, %v287
    %v296 = vmul.f32 %v293, %v288
    %v297 = vmul.f32 %v269, %v295
    %v298 = vmul.f32 %v270, %v296
    %v300 = vlaneseq
    %v301 = vshrl.u32 %v300, 7
    %v302 = vsub.s32 0, %v301
    %v303 = vrot.slane %v75, %v302
    %v305 = vsub.f32 %v303, %v297
    %v306 = vsub.f32 %v303, %v298
    %v307 = vmul.f32 %v259, %v295
    %v308 = vmul.f32 %v262, %v296
    %v309 = vadd.f32 %v307, %v305
    %v310 = vadd.f32 %v308, %v306
    %v311 = vmul.f32 %v309, 0.5
    %v312 = vmul.f32 %v310, 0.5
    %v313 = vmul.f32 %v309, 0.044715
    %v314 = vmul.f32 %v310, 0.044715
    %v315 = vmul.f32 %v313, %v309
    %v316 = vmul.f32 %v314, %v310
    %v317 = vmul.f32 %v315, %v309
    %v318 = vmul.f32 %v316, %v310
    %v319 = vadd.f32 %v309, %v317
    %v320 = vadd.f32 %v310, %v318
    %v321 = vmul.f32 %v319, 0.7978846
    %v322 = vmul.f32 %v320, 0.7978846
    %v323 = vtanh.pop %v321
    %v324 = vtanh.pop %v322
    %v325 = vadd.f32 %v323, 1.0
    %v326 = vadd.f32 %v324, 1.0
    %v327 = vmul.f32 %v311, %v325
    %v328 = vmul.f32 %v312, %v326
    %v329 = vpack.c.bf16 %v328, %v327
    %v331 = vlaneseq
    %v332 = vshrl.u32 %v331, 7
    %v333 = vsub.s32 0, %v332
    %v334 = vrot.slane %v108, %v333
    %v352 = vunpack.c.l.b16 %v92
    %v353 = vunpack.c.l.b16 %v93
    %v354 = vunpack.c.l.b16 %v94
    %v355 = vunpack.c.l.b16 %v95
    %v356 = vunpack.c.l.b16 %v96
    %v357 = vunpack.c.l.b16 %v97
    %v358 = vunpack.c.l.b16 %v98
    %v359 = vunpack.c.l.b16 %v99
    %v360 = vunpack.c.l.b16 %v100
    %v361 = vunpack.c.l.b16 %v101
    %v362 = vunpack.c.l.b16 %v102
    %v363 = vunpack.c.l.b16 %v103
    %v364 = vunpack.c.l.b16 %v104
    %v365 = vunpack.c.l.b16 %v105
    %v366 = vunpack.c.l.b16 %v106
    %v367 = vunpack.c.l.b16 %v107
    %v368 = vpack.c.b16 %v353, %v352
    %v369 = vpack.c.b16 %v355, %v354
    %v370 = vpack.c.b16 %v357, %v356
    %v371 = vpack.c.b16 %v359, %v358
    %v372 = vpack.c.b16 %v361, %v360
    %v373 = vpack.c.b16 %v363, %v362
    %v374 = vpack.c.b16 %v365, %v364
    %v375 = vpack.c.b16 %v367, %v366
    %384 = vmatprep.subr.bf16.mxu0 0
    %385 = vmatpush1.bf16.msra.mxu0 %v375
    %386 = vmatprep.subr.bf16.mxu0 0
    %387 = vmatpush1.bf16.msra.mxu0 %v374
    %388 = vmatprep.subr.bf16.mxu0 0
    %389 = vmatpush1.bf16.msra.mxu0 %v373
    %390 = vmatprep.subr.bf16.mxu0 0
    %391 = vmatpush1.bf16.msra.mxu0 %v372
    %392 = vmatprep.subr.bf16.mxu0 0
    %393 = vmatpush1.bf16.msra.mxu0 %v371
    %394 = vmatprep.subr.bf16.mxu0 0
    %395 = vmatpush1.bf16.msra.mxu0 %v370
    %396 = vmatprep.subr.bf16.mxu0 0
    %397 = vmatpush1.bf16.msra.mxu0 %v369
    %398 = vmatprep.subr.bf16.mxu0 0
    %399 = vmatpush1.bf16.msra.mxu0 %v368
    %400 = vmatprep.subr.bf16.mxu0 0
    %401 = vmatpush2.bf16.msra.mxu0 0
    %402 = vmatprep.subr.bf16.mxu0 0
    %403 = vmatpush2.bf16.msra.mxu0 0
    %404 = vmatprep.subr.bf16.mxu0 0
    %405 = vmatpush2.bf16.msra.mxu0 0
    %406 = vmatprep.subr.bf16.mxu0 0
    %407 = vmatpush2.bf16.msra.mxu0 0
    %408 = vmatprep.subr.bf16.mxu0 0
    %409 = vmatpush2.bf16.msra.mxu0 0
    %410 = vmatprep.subr.bf16.mxu0 0
    %411 = vmatpush2.bf16.msra.mxu0 0
    %412 = vmatprep.subr.bf16.mxu0 0
    %413 = vmatpush2.bf16.msra.mxu0 0
    %414 = vmatprep.subr.bf16.mxu0 0
    %415 = vmatpush2.bf16.msra.mxu0 0
    %416 = vmatprep.mubr.bf16.mxu0 0
    %417 = vmatmul.mubr.bf16.gmra.mxu0 %v329
    %v418 = vpop.f32.mrf.mxu0
    %v419 = vadd.f32 %v334, %v418
    %v420 = vpop.f32.mrf.mxu0
    %v421 = vpop.f32.mrf.mxu0
    %v422 = vadd.f32 %v334, %v421
    %v423 = vpop.f32.mrf.mxu0
    %424 = vdwg.mxu0
    %425 = vst [vmem:[#allocation8] sm:$0xff] %v419
    %426 = vst [vmem:[#allocation8 + $0x8] sm:$0xff] %v422
    // Predicated region
    $region46: #{tpu_custom_call.1} parent=1 // pred_check
      _
    $region47: #{tpu_custom_call.1} parent=1 // pred_check_branch
      %428 = sbr.rel (0) target = $region49
    $region48: #{tpu_custom_call.1} parent=1 // pred_region
      %s430 = ssub.s32 256, 256
      %431 = vsyncadd [#allocation4], %s430
      %s432 = sshll.u32 [#allocation8], 4
      %s433 = int_to_ptr.vmem [resolvable:$true] %s432
      %438 = dma.vmem_to_hbm [thread:$0]  %s433, 256, %s8, [#allocation4], 128, 128, 8
    $region49: #{tpu_custom_call.1} parent=1 // pred_fallthru
      _
    // Predicated region
    $region50: #{tpu_custom_call.1} parent=1 // pred_check
      _
    $region51: #{tpu_custom_call.1} parent=1 // pred_check_branch
      %440 = sbr.rel (0) target = $region53
    $region52: #{tpu_custom_call.1} parent=1 // pred_region
      %441 = dma.done [#allocation4], 256
    $region53: #{tpu_custom_call.1} parent=1 // pred_fallthru
      _
    %442 = vsyncpa [#allocation3], 1
    %443 = vsyncpa [#allocation6], 1
    %444 = vsyncpa [#allocation4], 1

// kernel: tpu_custom_call.1
$region0: #{tpu_custom_call.1}
  #allocation0 [shape = 'u32[]', space=smem, size = 0x4, offset = 0x4, fixed_abs, tag = 'smem constant byte address 0x4 - core index']
  #allocation1 [shape = 'u32[144,128]{1,0:T(1,128)}', space=vmem, size = 0x12000, scoped, tag = 'internal scratch']
  %s0 = inlined_call_operand.hbm [shape: f32[16,128], index: 0, kind: input, shape index: {}]
  %s1 = inlined_call_operand.vmem [shape: f32[1,128], index: 1, kind: input, shape index: {}]
  %s2 = inlined_call_operand.vmem [shape: f32[1,128], index: 2, kind: input, shape index: {}]
  %s3 = inlined_call_operand.hbm [shape: bf16[128,128], index: 3, kind: input, shape index: {}]
  %s4 = inlined_call_operand.vmem [shape: f32[1,128], index: 4, kind: input, shape index: {}]
  %s5 = inlined_call_operand.vmem [shape: f32[1,128], index: 5, kind: input, shape index: {}]
  %s6 = inlined_call_operand.hbm [shape: bf16[128,128], index: 6, kind: input, shape index: {}]
  %s7 = inlined_call_operand.vmem [shape: f32[1,128], index: 7, kind: input, shape index: {}]
  %s8 = inlined_call_operand.hbm [shape: f32[16,128], index: 8, kind: output, shape index: {}]
  %s9 = sld [smem:[#allocation0]]
  $region54: #{tpu_custom_call.1} parent=0
    _
  %s11 = ssub.s32 1, %s9
  %s12 = scalar_select 0, %s11, %s9
  $region1: #{tpu_custom_call.1} parent=0
    #allocation2 [shape = 'u8[8192]{0}', space=vmem, size = 0x2000, scoped, tag = 'input window, operand 0, single buffered']
    #allocation3 [shape = 's32[1]{0}', space=sflag, size = 0x4, scoped, tag = 'scoped memory for tpu_custom_call.1']
    #allocation4 [shape = 's32[1]{0}', space=sflag, size = 0x4, scoped, tag = 'scoped memory for tpu_custom_call.1']
    #allocation5 [shape = 'u8[32768]{0}', space=vmem, size = 0x8000, scoped, tag = 'input window, operand 3, single buffered']
    #allocation6 [shape = 's32[1]{0}', space=sflag, size = 0x4, scoped, tag = 'scoped memory for tpu_custom_call.1']
    #allocation7 [shape = 'u8[32768]{0}', space=vmem, size = 0x8000, scoped, tag = 'input window, operand 6, single buffered']
    #allocation8 [shape = 'u8[8192]{0}', space=vmem, size = 0x2000, scoped, tag = 'output window, operand 0, single buffered']
    %13 = vsyncpa [#allocation3], 0
    %14 = vsyncpa [#allocation6], 0
    %15 = vsyncpa [#allocation4], 0
    // Predicated region
    $region2: #{tpu_custom_call.1} parent=1 // pred_check
      _
    $region3: #{tpu_custom_call.1} parent=1 // pred_check_branch
      %17 = sbr.rel (0) target = $region5
    $region4: #{tpu_custom_call.1} parent=1 // pred_region
      %s19 = ssub.s32 256, 256
      %20 = vsyncadd [#allocation3], %s19
      %s21 = sshll.u32 [#allocation2], 4
      %s22 = int_to_ptr.vmem [resolvable:$true] %s21
      %27 = dma.hbm_to_vmem [thread:$0]  %s0, 256, %s22, [#allocation3], 128, 128, 8
    $region5: #{tpu_custom_call.1} parent=1 // pred_fallthru
      _
    // Predicated region
    $region6: #{tpu_custom_call.1} parent=1 // pred_check
      _
    $region7: #{tpu_custom_call.1} parent=1 // pred_check_branch
      %29 = sbr.rel (0) target = $region9
    $region8: #{tpu_custom_call.1} parent=1 // pred_region
      _
    $region9: #{tpu_custom_call.1} parent=1 // pred_fallthru
      _
    // Predicated region
    $region10: #{tpu_custom_call.1} parent=1 // pred_check
      _
    $region11: #{tpu_custom_call.1} parent=1 // pred_check_branch
      %31 = sbr.rel (0) target = $region13
    $region12: #{tpu_custom_call.1} parent=1 // pred_region
      _
    $region13: #{tpu_custom_call.1} parent=1 // pred_fallthru
      _
    // Predicated region
    $region14: #{tpu_custom_call.1} parent=1 // pred_check
      _
    $region15: #{tpu_custom_call.1} parent=1 // pred_check_branch
      %33 = sbr.rel (0) target = $region17
    $region16: #{tpu_custom_call.1} parent=1 // pred_region
      %s35 = ssub.s32 1024, 1024
      %36 = vsyncadd [#allocation6], %s35
      %s37 = sshll.u32 [#allocation5], 4
      %s38 = int_to_ptr.vmem [resolvable:$true] %s37
      %43 = dma.hbm_to_vmem [thread:$0]  %s3, 1024, %s38, [#allocation6], 64, 64, 4
    $region17: #{tpu_custom_call.1} parent=1 // pred_fallthru
      _
    // Predicated region
    $region18: #{tpu_custom_call.1} parent=1 // pred_check
      _
    $region19: #{tpu_custom_call.1} parent=1 // pred_check_branch
      %45 = sbr.rel (0) target = $region21
    $region20: #{tpu_custom_call.1} parent=1 // pred_region
      _
    $region21: #{tpu_custom_call.1} parent=1 // pred_fallthru
      _
    // Predicated region
    $region22: #{tpu_custom_call.1} parent=1 // pred_check
      _
    $region23: #{tpu_custom_call.1} parent=1 // pred_check_branch
      %47 = sbr.rel (0) target = $region25
    $region24: #{tpu_custom_call.1} parent=1 // pred_region
      _
    $region25: #{tpu_custom_call.1} parent=1 // pred_fallthru
      _
    // Predicated region
    $region26: #{tpu_custom_call.1} parent=1 // pred_check
      _
    $region27: #{tpu_custom_call.1} parent=1 // pred_check_branch
      %49 = sbr.rel (0) target = $region29
    $region28: #{tpu_custom_call.1} parent=1 // pred_region
      %s51 = ssub.s32 1024, 1024
      %52 = vsyncadd [#allocation6], %s51
      %s53 = sshll.u32 [#allocation7], 4
      %s54 = int_to_ptr.vmem [resolvable:$true] %s53
      %59 = dma.hbm_to_vmem [thread:$0]  %s6, 1024, %s54, [#allocation6], 64, 64, 4
    $region29: #{tpu_custom_call.1} parent=1 // pred_fallthru
      _
    // Predicated region
    $region30: #{tpu_custom_call.1} parent=1 // pred_check
      _
    $region31: #{tpu_custom_call.1} parent=1 // pred_check_branch
      %61 = sbr.rel (0) target = $region33
    $region32: #{tpu_custom_call.1} parent=1 // pred_region
      _
    $region33: #{tpu_custom_call.1} parent=1 // pred_fallthru
      _
    // Predicated region
    $region34: #{tpu_custom_call.1} parent=1 // pred_check
      _
    $region35: #{tpu_custom_call.1} parent=1 // pred_check_branch
      %63 = sbr.rel (0) target = $region37
    $region36: #{tpu_custom_call.1} parent=1 // pred_region
      %64 = dma.done [#allocation3], 256
    $region37: #{tpu_custom_call.1} parent=1 // pred_fallthru
      _
    // Predicated region
    $region38: #{tpu_custom_call.1} parent=1 // pred_check
      _
    $region39: #{tpu_custom_call.1} parent=1 // pred_check_branch
      %66 = sbr.rel (0) target = $region41
    $region40: #{tpu_custom_call.1} parent=1 // pred_region
      %67 = dma.done [#allocation6], 1024
    $region41: #{tpu_custom_call.1} parent=1 // pred_fallthru
      _
    // Predicated region
    $region42: #{tpu_custom_call.1} parent=1 // pred_check
      _
    $region43: #{tpu_custom_call.1} parent=1 // pred_check_branch
      %69 = sbr.rel (0) target = $region45
    $region44: #{tpu_custom_call.1} parent=1 // pred_region
      %70 = dma.done [#allocation6], 1024
    $region45: #{tpu_custom_call.1} parent=1 // pred_fallthru
      _
    %v72 = vld [vmem:[%s1] sm:$0x1]
    %v73 = vld [vmem:[%s2] sm:$0x1]
    %v74 = vld [vmem:[%s4] sm:$0x1]
    %v75 = vld [vmem:[%s5] sm:$0x1]
    %v76 = vld [vmem:[#allocation5] sm:$0xf]
    %v77 = vld [vmem:[#allocation5 + $0x4] sm:$0xf]
    %v78 = vld [vmem:[#allocation5 + $0x8] sm:$0xf]
    %v79 = vld [vmem:[#allocation5 + $0xc] sm:$0xf]
    %v80 = vld [vmem:[#allocation5 + $0x10] sm:$0xf]
    %v81 = vld [vmem:[#allocation5 + $0x14] sm:$0xf]
    %v82 = vld [vmem:[#allocation5 + $0x18] sm:$0xf]
    %v83 = vld [vmem:[#allocation5 + $0x1c] sm:$0xf]
    %v84 = vld [vmem:[#allocation5 + $0x20] sm:$0xf]
    %v85 = vld [vmem:[#allocation5 + $0x24] sm:$0xf]
    %v86 = vld [vmem:[#allocation5 + $0x28] sm:$0xf]
    %v87 = vld [vmem:[#allocation5 + $0x2c] sm:$0xf]
    %v88 = vld [vmem:[#allocation5 + $0x30] sm:$0xf]
    %v89 = vld [vmem:[#allocation5 + $0x34] sm:$0xf]
    %v90 = vld [vmem:[#allocation5 + $0x38] sm:$0xf]
    %v91 = vld [vmem:[#allocation5 + $0x3c] sm:$0xf]
    %v92 = vld [vmem:[#allocation7] sm:$0xf]
    %v93 = vld [vmem:[#allocation7 + $0x4] sm:$0xf]
    %v94 = vld [vmem:[#allocation7 + $0x8] sm:$0xf]
    %v95 = vld [vmem:[#allocation7 + $0xc] sm:$0xf]
    %v96 = vld [vmem:[#allocation7 + $0x10] sm:$0xf]
    %v97 = vld [vmem:[#allocation7 + $0x14] sm:$0xf]
    %v98 = vld [vmem:[#allocation7 + $0x18] sm:$0xf]
    %v99 = vld [vmem:[#allocation7 + $0x1c] sm:$0xf]
    %v100 = vld [vmem:[#allocation7 + $0x20] sm:$0xf]
    %v101 = vld [vmem:[#allocation7 + $0x24] sm:$0xf]
    %v102 = vld [vmem:[#allocation7 + $0x28] sm:$0xf]
    %v103 = vld [vmem:[#allocation7 + $0x2c] sm:$0xf]
    %v104 = vld [vmem:[#allocation7 + $0x30] sm:$0xf]
    %v105 = vld [vmem:[#allocation7 + $0x34] sm:$0xf]
    %v106 = vld [vmem:[#allocation7 + $0x38] sm:$0xf]
    %v107 = vld [vmem:[#allocation7 + $0x3c] sm:$0xf]
    %v108 = vld [vmem:[%s7] sm:$0x1]
    %v109 = vld [vmem:[#allocation2] sm:$0xff]
    %v110 = vld [vmem:[#allocation2 + $0x8] sm:$0xff]
    %111 = vadd.xlane.f32.xlu0 %v109
    %v112 = vpop.xlane.xlu0 %111
    %113 = vadd.xlane.f32.xlu0 %v110
    %v114 = vpop.xlane.xlu0 %113
    %v115 = vmul.f32 %v112, 0.03125
    %v116 = vmul.f32 %v114, 0.03125
    %v117 = vmul.f32 %v109, %v109
    %v118 = vmul.f32 %v110, %v110
    %119 = vadd.xlane.f32.xlu0 %v117
    %v120 = vpop.xlane.xlu0 %119
    %121 = vadd.xlane.f32.xlu0 %v118
    %v122 = vpop.xlane.xlu0 %121
    %v123 = vmul.f32 %v120, 0.03125
    %v124 = vmul.f32 %v122, 0.03125
    %v125 = vmul.f32 %v115, %v115
    %v126 = vmul.f32 %v116, %v116
    %v127 = vsub.f32 %v123, %v125
    %v128 = vsub.f32 %v124, %v126
    %v129 = vmax.f32 %v127, 0.0
    %v130 = vmax.f32 %v128, 0.0
    %v131 = vadd.f32 %v129, 1e-05
    %v132 = vadd.f32 %v130, 1e-05
    %v133 = vrsqrt.pop %v131
    %v134 = vrsqrt.pop %v132
    %v136 = vlaneseq
    %v137 = vshrl.u32 %v136, 7
    %v138 = vsub.s32 0, %v137
    %v139 = vrot.slane %v72, %v138
    %v141 = vmul.f32 %v139, %v133
    %v142 = vmul.f32 %v139, %v134
    %v143 = vmul.f32 %v115, %v141
    %v144 = vmul.f32 %v116, %v142
    %v146 = vlaneseq
    %v147 = vshrl.u32 %v146, 7
    %v148 = vsub.s32 0, %v147
    %v149 = vrot.slane %v73, %v148
    %v151 = vsub.f32 %v149, %v143
    %v152 = vsub.f32 %v149, %v144
    %v153 = vmul.f32 %v109, %v141
    %v154 = vmul.f32 %v110, %v142
    %v155 = vadd.f32 %v153, %v151
    %v156 = vadd.f32 %v154, %v152
    %v157 = vmul.f32 %v155, 0.5
    %v158 = vmul.f32 %v156, 0.5
    %v159 = vmul.f32 %v155, 0.044715
    %v160 = vmul.f32 %v156, 0.044715
    %v161 = vmul.f32 %v159, %v155
    %v162 = vmul.f32 %v160, %v156
    %v163 = vmul.f32 %v161, %v155
    %v164 = vmul.f32 %v162, %v156
    %v165 = vadd.f32 %v155, %v163
    %v166 = vadd.f32 %v156, %v164
    %v167 = vmul.f32 %v165, 0.7978846
    %v168 = vmul.f32 %v166, 0.7978846
    %v169 = vtanh.pop %v167
    %v170 = vtanh.pop %v168
    %v171 = vadd.f32 %v169, 1.0
    %v172 = vadd.f32 %v170, 1.0
    %v173 = vmul.f32 %v157, %v171
    %v174 = vmul.f32 %v158, %v172
    %v175 = vpack.c.bf16 %v174, %v173
    %v192 = vunpack.c.l.b16 %v76
    %v193 = vunpack.c.l.b16 %v77
    %v194 = vunpack.c.l.b16 %v78
    %v195 = vunpack.c.l.b16 %v79
    %v196 = vunpack.c.l.b16 %v80
    %v197 = vunpack.c.l.b16 %v81
    %v198 = vunpack.c.l.b16 %v82
    %v199 = vunpack.c.l.b16 %v83
    %v200 = vunpack.c.l.b16 %v84
    %v201 = vunpack.c.l.b16 %v85
    %v202 = vunpack.c.l.b16 %v86
    %v203 = vunpack.c.l.b16 %v87
    %v204 = vunpack.c.l.b16 %v88
    %v205 = vunpack.c.l.b16 %v89
    %v206 = vunpack.c.l.b16 %v90
    %v207 = vunpack.c.l.b16 %v91
    %v208 = vpack.c.b16 %v193, %v192
    %v209 = vpack.c.b16 %v195, %v194
    %v210 = vpack.c.b16 %v197, %v196
    %v211 = vpack.c.b16 %v199, %v198
    %v212 = vpack.c.b16 %v201, %v200
    %v213 = vpack.c.b16 %v203, %v202
    %v214 = vpack.c.b16 %v205, %v204
    %v215 = vpack.c.b16 %v207, %v206
    %224 = vmatprep.subr.bf16.mxu0 0
    %225 = vmatpush1.bf16.msra.mxu0 %v215
    %226 = vmatprep.subr.bf16.mxu0 0
    %227 = vmatpush1.bf16.msra.mxu0 %v214
    %228 = vmatprep.subr.bf16.mxu0 0
    %229 = vmatpush1.bf16.msra.mxu0 %v213
    %230 = vmatprep.subr.bf16.mxu0 0
    %231 = vmatpush1.bf16.msra.mxu0 %v212
    %232 = vmatprep.subr.bf16.mxu0 0
    %233 = vmatpush1.bf16.msra.mxu0 %v211
    %234 = vmatprep.subr.bf16.mxu0 0
    %235 = vmatpush1.bf16.msra.mxu0 %v210
    %236 = vmatprep.subr.bf16.mxu0 0
    %237 = vmatpush1.bf16.msra.mxu0 %v209
    %238 = vmatprep.subr.bf16.mxu0 0
    %239 = vmatpush1.bf16.msra.mxu0 %v208
    %240 = vmatprep.subr.bf16.mxu0 0
    %241 = vmatpush2.bf16.msra.mxu0 0
    %242 = vmatprep.subr.bf16.mxu0 0
    %243 = vmatpush2.bf16.msra.mxu0 0
    %244 = vmatprep.subr.bf16.mxu0 0
    %245 = vmatpush2.bf16.msra.mxu0 0
    %246 = vmatprep.subr.bf16.mxu0 0
    %247 = vmatpush2.bf16.msra.mxu0 0
    %248 = vmatprep.subr.bf16.mxu0 0
    %249 = vmatpush2.bf16.msra.mxu0 0
    %250 = vmatprep.subr.bf16.mxu0 0
    %251 = vmatpush2.bf16.msra.mxu0 0
    %252 = vmatprep.subr.bf16.mxu0 0
    %253 = vmatpush2.bf16.msra.mxu0 0
    %254 = vmatprep.subr.bf16.mxu0 0
    %255 = vmatpush2.bf16.msra.mxu0 0
    %256 = vmatprep.mubr.bf16.mxu0 0
    %257 = vmatmul.mubr.bf16.gmra.mxu0 %v175
    %v258 = vpop.f32.mrf.mxu0
    %v259 = vadd.f32 0.0, %v258
    %v260 = vpop.f32.mrf.mxu0
    %v261 = vpop.f32.mrf.mxu0
    %v262 = vadd.f32 0.0, %v261
    %v263 = vpop.f32.mrf.mxu0
    %264 = vdwg.mxu0
    %265 = vadd.xlane.f32.xlu0 %v259
    %v266 = vpop.xlane.xlu0 %265
    %267 = vadd.xlane.f32.xlu0 %v262
    %v268 = vpop.xlane.xlu0 %267
    %v269 = vmul.f32 %v266, 0.015625
    %v270 = vmul.f32 %v268, 0.015625
    %v271 = vmul.f32 %v259, %v259
    %v272 = vmul.f32 %v262, %v262
    %273 = vadd.xlane.f32.xlu0 %v271
    %v274 = vpop.xlane.xlu0 %273
    %275 = vadd.xlane.f32.xlu0 %v272
    %v276 = vpop.xlane.xlu0 %275
    %v277 = vmul.f32 %v274, 0.015625
    %v278 = vmul.f32 %v276, 0.015625
    %v279 = vmul.f32 %v269, %v269
    %v280 = vmul.f32 %v270, %v270
    %v281 = vsub.f32 %v277, %v279
    %v282 = vsub.f32 %v278, %v280
    %v283 = vmax.f32 %v281, 0.0
    %v284 = vmax.f32 %v282, 0.0
    %v285 = vadd.f32 %v283, 1e-05
    %v286 = vadd.f32 %v284, 1e-05
    %v287 = vrsqrt.pop %v285
    %v288 = vrsqrt.pop %v286
    %v290 = vlaneseq
    %v291 = vshrl.u32 %v290, 7
    %v292 = vsub.s32 0, %v291
    %v293 = vrot.slane %v74, %v292
    %v295 = vmul.f32 %v293, %v287
    %v296 = vmul.f32 %v293, %v288
    %v297 = vmul.f32 %v269, %v295
    %v298 = vmul.f32 %v270, %v296
    %v300 = vlaneseq
    %v301 = vshrl.u32 %v300, 7
    %v302 = vsub.s32 0, %v301
    %v303 = vrot.slane %v75, %v302
    %v305 = vsub.f32 %v303, %v297
    %v306 = vsub.f32 %v303, %v298
    %v307 = vmul.f32 %v259, %v295
    %v308 = vmul.f32 %v262, %v296
    %v309 = vadd.f32 %v307, %v305
    %v310 = vadd.f32 %v308, %v306
    %v311 = vmul.f32 %v309, 0.5
    %v312 = vmul.f32 %v310, 0.5
    %v313 = vmul.f32 %v309, 0.044715
    %v314 = vmul.f32 %v310, 0.044715
    %v315 = vmul.f32 %v313, %v309
    %v316 = vmul.f32 %v314, %v310
    %v317 = vmul.f32 %v315, %v309
    %v318 = vmul.f32 %v316, %v310
    %v319 = vadd.f32 %v309, %v317
    %v320 = vadd.f32 %v310, %v318
    %v321 = vmul.f32 %v319, 0.7978846
    %v322 = vmul.f32 %v320, 0.7978846
    %v323 = vtanh.pop %v321
    %v324 = vtanh.pop %v322
    %v325 = vadd.f32 %v323, 1.0
    %v326 = vadd.f32 %v324, 1.0
    %v327 = vmul.f32 %v311, %v325
    %v328 = vmul.f32 %v312, %v326
    %v329 = vpack.c.bf16 %v328, %v327
    %v331 = vlaneseq
    %v332 = vshrl.u32 %v331, 7
    %v333 = vsub.s32 0, %v332
    %v334 = vrot.slane %v108, %v333
    %v352 = vunpack.c.l.b16 %v92
    %v353 = vunpack.c.l.b16 %v93
    %v354 = vunpack.c.l.b16 %v94
    %v355 = vunpack.c.l.b16 %v95
    %v356 = vunpack.c.l.b16 %v96
    %v357 = vunpack.c.l.b16 %v97
    %v358 = vunpack.c.l.b16 %v98
    %v359 = vunpack.c.l.b16 %v99
    %v360 = vunpack.c.l.b16 %v100
    %v361 = vunpack.c.l.b16 %v101
    %v362 = vunpack.c.l.b16 %v102
    %v363 = vunpack.c.l.b16 %v103
    %v364 = vunpack.c.l.b16 %v104
    %v365 = vunpack.c.l.b16 %v105
    %v366 = vunpack.c.l.b16 %v106
    %v367 = vunpack.c.l.b16 %v107
    %v368 = vpack.c.b16 %v353, %v352
    %v369 = vpack.c.b16 %v355, %v354
    %v370 = vpack.c.b16 %v357, %v356
    %v371 = vpack.c.b16 %v359, %v358
    %v372 = vpack.c.b16 %v361, %v360
    %v373 = vpack.c.b16 %v363, %v362
    %v374 = vpack.c.b16 %v365, %v364
    %v375 = vpack.c.b16 %v367, %v366
    %384 = vmatprep.subr.bf16.mxu0 0
    %385 = vmatpush1.bf16.msra.mxu0 %v375
    %386 = vmatprep.subr.bf16.mxu0 0
    %387 = vmatpush1.bf16.msra.mxu0 %v374
    %388 = vmatprep.subr.bf16.mxu0 0
    %389 = vmatpush1.bf16.msra.mxu0 %v373
    %390 = vmatprep.subr.bf16.mxu0 0
    %391 = vmatpush1.bf16.msra.mxu0 %v372
    %392 = vmatprep.subr.bf16.mxu0 0
    %393 = vmatpush1.bf16.msra.mxu0 %v371
    %394 = vmatprep.subr.bf16.mxu0 0
    %395 = vmatpush1.bf16.msra.mxu0 %v370
    %396 = vmatprep.subr.bf16.mxu0 0
    %397 = vmatpush1.bf16.msra.mxu0 %v369
    %398 = vmatprep.subr.bf16.mxu0 0
    %399 = vmatpush1.bf16.msra.mxu0 %v368
    %400 = vmatprep.subr.bf16.mxu0 0
    %401 = vmatpush2.bf16.msra.mxu0 0
    %402 = vmatprep.subr.bf16.mxu0 0
    %403 = vmatpush2.bf16.msra.mxu0 0
    %404 = vmatprep.subr.bf16.mxu0 0
    %405 = vmatpush2.bf16.msra.mxu0 0
    %406 = vmatprep.subr.bf16.mxu0 0
    %407 = vmatpush2.bf16.msra.mxu0 0
    %408 = vmatprep.subr.bf16.mxu0 0
    %409 = vmatpush2.bf16.msra.mxu0 0
    %410 = vmatprep.subr.bf16.mxu0 0
    %411 = vmatpush2.bf16.msra.mxu0 0
    %412 = vmatprep.subr.bf16.mxu0 0
    %413 = vmatpush2.bf16.msra.mxu0 0
    %414 = vmatprep.subr.bf16.mxu0 0
    %415 = vmatpush2.bf16.msra.mxu0 0
    %416 = vmatprep.mubr.bf16.mxu0 0
    %417 = vmatmul.mubr.bf16.gmra.mxu0 %v329
    %v418 = vpop.f32.mrf.mxu0
    %v419 = vadd.f32 %v334, %v418
    %v420 = vpop.f32.mrf.mxu0
    %v421 = vpop.f32.mrf.mxu0
    %v422 = vadd.f32 %v334, %v421
    %v423 = vpop.f32.mrf.mxu0
    %424 = vdwg.mxu0
    %425 = vst [vmem:[#allocation8] sm:$0xff] %v419
    %426 = vst [vmem:[#allocation8 + $0x8] sm:$0xff] %v422
    // Predicated region
    $region46: #{tpu_custom_call.1} parent=1 // pred_check
      _
    $region47: #{tpu_custom_call.1} parent=1 // pred_check_branch
      %428 = sbr.rel (0) target = $region49
    $region48: #{tpu_custom_call.1} parent=1 // pred_region
      %s430 = ssub.s32 256, 256
      %431 = vsyncadd [#allocation4], %s430
      %s432 = sshll.u32 [#allocation8], 4
      %s433 = int_to_ptr.vmem [resolvable:$true] %s432
      %438 = dma.vmem_to_hbm [thread:$0]  %s433, 256, %s8, [#allocation4], 128, 128, 8
    $region49: #{tpu_custom_call.1} parent=1 // pred_fallthru
      _
    // Predicated region
    $region50: #{tpu_custom_call.1} parent=1 // pred_check
      _
    $region51: #{tpu_custom_call.1} parent=1 // pred_check_branch
      %440 = sbr.rel (0) target = $region53
    $region52: #{tpu_custom_call.1} parent=1 // pred_region
      %441 = dma.done [#allocation4], 256
    $region53: #{tpu_custom_call.1} parent=1 // pred_fallthru
      _
    %442 = vsyncpa [#allocation3], 1
    %443 = vsyncpa [#allocation6], 1
    %444 = vsyncpa [#allocation4], 1

</llo_original>
